<compile_context>
chip_gen: v5e
topology: v5e:2x2
jax: 0.10.0
libtpu: 0.0.40
codegen_flags: <defaults>
</compile_context>

<pallas_src>
import functools

import jax
import jax.numpy as jnp
from jax.experimental import pallas as pl
from jax.experimental.pallas import tpu as pltpu


# ----------------------------------------------------------------------------
# Helpers
# ----------------------------------------------------------------------------

def _round_up(x, m):
    return (x + m - 1) // m * m


def _cdiv(a, b):
    return (a + b - 1) // b


def _vmem_budget_bytes():
    """Generation-aware double-buffered VMEM budget for tile sizing."""
    kind = ""
    try:
        kind = jax.devices()[0].device_kind.lower()
    except Exception:  # pragma: no cover
        pass
    if "v7" in kind:
        return 48 * 1024 * 1024          # v7x: 64 MiB physical VMEM per TC
    if ("v5" in kind) or ("v6" in kind):
        return 96 * 1024 * 1024          # v5e/v6e: 128 MiB physical VMEM
    return 48 * 1024 * 1024              # unknown: be conservative


# ----------------------------------------------------------------------------
# Pallas kernel: fused attention gate (channel-major, spatial axis = lanes)
# ----------------------------------------------------------------------------

def _attn_gate_kernel(g_ref, x_ref, wg_ref, wx_ref, b_ref, wpsi_ref, bpsi_ref,
                      o_ref):
    """Per (batch, spatial-tile):
       g_ref   : (1, F_g, ts)  bf16
       x_ref   : (1, F_l, ts)  bf16
       wg_ref  : (F_int, F_g)  bf16   (W_g weight with BN scale folded in)
       wx_ref  : (F_int, F_l)  bf16   (W_x weight with BN scale folded in)
       b_ref   : (F_int, 1)    f32    (sum of both folded conv+BN biases)
       wpsi_ref: (F_int, 1)    f32    (psi weight * psi BN scale)
       bpsi_ref: (1, 1)        f32    (SMEM scalar)
       o_ref   : (1, F_l, ts)  f32
    """
    g_t = g_ref[0]                       # (F_g, ts)  bf16
    x_t = x_ref[0]                       # (F_l, ts)  bf16

    # Two small MXU dots, bf16 operands, f32 accumulation.
    g1 = jnp.dot(wg_ref[...], g_t, preferred_element_type=jnp.float32)
    x1 = jnp.dot(wx_ref[...], x_t, preferred_element_type=jnp.float32)

    # relu(g1 + x1 + b) -> 1x1 psi conv (F_int -> 1) -> sigmoid -> gate x.
    p = jnp.maximum(g1 + x1 + b_ref[...], 0.0)                 # (F_int, ts) f32
    a = jnp.sum(p * wpsi_ref[...], axis=0, keepdims=True)      # (1, ts)
    a = jax.nn.sigmoid(a + bpsi_ref[0, 0])

    o_ref[0] = x_t.astype(jnp.float32) * a                     # (F_l, ts)


# ----------------------------------------------------------------------------
# Wrapper (NCHW in / NCHW out, matching the PyTorch module)
# ----------------------------------------------------------------------------

def _fold_bn(gamma, beta, mean, var, eps=1e-5):
    s = gamma / jnp.sqrt(var + eps)
    b = beta - mean * s
    return s, b


def attention_block_forward(g, x, params, *, tile_s=2048, eps=1e-5):
    """g: (N, F_g, H, W), x: (N, F_l, H, W) float32 NCHW -> (N, F_l, H, W) f32."""
    N, F_g, Hg, Wg = g.shape
    _, F_l, H, W = x.shape

    # PyTorch interpolates g1 to x1's spatial size (align_corners=False).
    # A 1x1 conv + affine commutes with bilinear interpolation (weights sum to
    # 1), so resize g itself here; the second interpolate branch is then dead.
    # TODO(synk): jax.image.resize antialiases when DOWN-sampling, unlike torch
    # F.interpolate; exact only for the usual upsample-g case / equal sizes.
    if (Hg, Wg) != (H, W):
        g = jax.image.resize(g, (N, F_g, H, W), method="bilinear")

    # Channel-major view: (N, C, H*W) is a free reshape of NCHW (no transpose).
    S = H * W
    g3 = g.reshape(N, F_g, S).astype(jnp.bfloat16)
    x3 = x.reshape(N, F_l, S).astype(jnp.bfloat16)

    # Fold BatchNorm (inference / running stats) into the 1x1 convs.
    sg, bg0 = _fold_bn(**params["wg_bn"], eps=eps)
    sx, bx0 = _fold_bn(**params["wx_bn"], eps=eps)

    wg = params["wg"]["w"][:, :, 0, 0]                       # (F_int, F_g)
    wx = params["wx"]["w"][:, :, 0, 0]                       # (F_int, F_l)
    wg_f = (wg * sg[:, None]).astype(jnp.bfloat16)           # (F_int, F_g)
    wx_f = (wx * sx[:, None]).astype(jnp.bfloat16)           # (F_int, F_l)
    b_comb = ((params["wg"]["b"] * sg + bg0) +
              (params["wx"]["b"] * sx + bx0)).reshape(-1, 1).astype(jnp.float32)

    sp, bp0 = _fold_bn(**params["psi_bn"], eps=eps)          # (1,), (1,)
    w_psi = (params["psi"]["w"][0, :, 0, 0] * sp[0]).reshape(-1, 1).astype(jnp.float32)
    b_psi = (params["psi"]["b"][0] * sp[0] + bp0[0]).reshape(1, 1).astype(jnp.float32)

    F_int = wg_f.shape[0]

    # --- Spatial tile selection (lane axis, multiple of 128) -----------------
    budget = _vmem_budget_bytes()
    # bytes per lane column: double-buffered bf16 g/x + f32 out + f32 intermediates
    bytes_per_col = 4 * F_g + 16 * F_l + 16 * F_int + 64
    Sp0 = _round_up(S, 128)
    ts = (budget // bytes_per_col) // 128 * 128
    ts = max(128, min(ts, tile_s, Sp0))
    ts = max(128, (ts // 128) * 128)
    # Keep >= 4 "parallel" grid steps when possible (megacore load balance).
    while ts > 128 and N * _cdiv(S, ts) < 4:
        ts = max(128, ((ts // 2) // 128) * 128)
    Sp = _round_up(S, ts)

    if Sp != S:
        g3 = jnp.pad(g3, ((0, 0), (0, 0), (0, Sp - S)))
        x3 = jnp.pad(x3, ((0, 0), (0, 0), (0, Sp - S)))

    grid = (N, Sp // ts)

    out = pl.pallas_call(
        _attn_gate_kernel,
        out_shape=jax.ShapeDtypeStruct((N, F_l, Sp), jnp.float32),
        grid=grid,
        in_specs=[
            pl.BlockSpec((1, F_g, ts), lambda n, j: (n, 0, j)),
            pl.BlockSpec((1, F_l, ts), lambda n, j: (n, 0, j)),
            pl.BlockSpec((F_int, F_g), lambda n, j: (0, 0)),
            pl.BlockSpec((F_int, F_l), lambda n, j: (0, 0)),
            pl.BlockSpec((F_int, 1), lambda n, j: (0, 0)),
            pl.BlockSpec((F_int, 1), lambda n, j: (0, 0)),
            pl.BlockSpec(memory_space=pltpu.MemorySpace.SMEM),   # psi bias scalar
        ],
        out_specs=pl.BlockSpec((1, F_l, ts), lambda n, j: (n, 0, j)),
        compiler_params=pltpu.CompilerParams(
            dimension_semantics=("parallel", "parallel"),
            vmem_limit_bytes=budget + 12 * 1024 * 1024,
        ),
    )(g3, x3, wg_f, wx_f, b_comb, w_psi, b_psi)

    if Sp != S:
        out = out[:, :, :S]
    return out.reshape(N, F_l, H, W)          # already NCHW; no transpose needed


# ----------------------------------------------------------------------------
# Pure-JAX reference (f32) for a sanity check
# ----------------------------------------------------------------------------

def attention_block_ref(g, x, params, eps=1e-5):
    def conv1x1_bn(y, conv, bn):
        w = conv["w"][:, :, 0, 0]                                   # (cout, cin)
        out = jnp.einsum("nchw,oc->nohw", y, w) + conv["b"][None, :, None, None]
        s = bn["gamma"] / jnp.sqrt(bn["var"] + eps)
        b = bn["beta"] - bn["mean"] * s
        return out * s[None, :, None, None] + b[None, :, None, None]

    g1 = conv1x1_bn(g, params["wg"], params["wg_bn"])
    x1 = conv1x1_bn(x, params["wx"], params["wx_bn"])
    p = jnp.maximum(g1 + x1, 0.0)
    psi = jax.nn.sigmoid(conv1x1_bn(p, params["psi"], params["psi_bn"]))
    return x * psi


# ----------------------------------------------------------------------------
# Deterministic parameter construction (mirrors module __init__ shapes)
# ----------------------------------------------------------------------------

def make_params(F_g, F_l, F_int, key):
    def conv1x1(k, cout, cin):
        kw, kb = jax.random.split(k)
        std = (2.0 / cin) ** 0.5
        return {"w": jax.random.normal(kw, (cout, cin, 1, 1), jnp.float32) * std,
                "b": jax.random.normal(kb, (cout,), jnp.float32) * 0.01}

    def bn(c):
        return {"gamma": jnp.ones((c,), jnp.float32),
                "beta": jnp.zeros((c,), jnp.float32),
                "mean": jnp.zeros((c,), jnp.float32),
                "var": jnp.ones((c,), jnp.float32)}

    k0, k1, k2 = jax.random.split(key, 3)
    return {"wg": conv1x1(k0, F_int, F_g), "wg_bn": bn(F_int),
            "wx": conv1x1(k1, F_int, F_l), "wx_bn": bn(F_int),
            "psi": conv1x1(k2, 1, F_int), "psi_bn": bn(1)}


# ----------------------------------------------------------------------------
if __name__ == "__main__":
    N, F_g, F_l, F_int, H, W = 2, 32, 32, 16, 16, 16

    key = jax.random.PRNGKey(0)
    kg, kx, kp = jax.random.split(key, 3)
    g = jax.random.normal(kg, (N, F_g, H, W), jnp.float32)
    x = jax.random.normal(kx, (N, F_l, H, W), jnp.float32)
    params = make_params(F_g, F_l, F_int, kp)

    fwd = jax.jit(functools.partial(attention_block_forward, tile_s=2048))
    out = jax.block_until_ready(fwd(g, x, params))

    assert out.shape == (N, F_l, H, W), out.shape
    assert bool(jnp.all(jnp.isfinite(out)))

    ref = attention_block_ref(g, x, params)
    rel_err = float(jnp.max(jnp.abs(out - ref)) / (jnp.max(jnp.abs(ref)) + 1e-6))
    assert rel_err < 2e-2, f"relative err {rel_err}"   # bf16 operands, f32 accumulate

    print("KERNEL_OK")
</pallas_src>

<mosaic_0001>
module attributes {stable_mosaic.version = 11 : i64} {
  func.func @_attn_gate_kernel(%arg0: i32, %arg1: i32, %arg2: memref<1x32x128xbf16, #tpu.memory_space<vmem>>, %arg3: memref<1x32x128xbf16, #tpu.memory_space<vmem>>, %arg4: memref<16x32xbf16, #tpu.memory_space<vmem>>, %arg5: memref<16x32xbf16, #tpu.memory_space<vmem>>, %arg6: memref<16x1xf32, #tpu.memory_space<vmem>>, %arg7: memref<16x1xf32, #tpu.memory_space<vmem>>, %arg8: memref<1x1xf32, #tpu.memory_space<smem>>, %arg9: memref<1x32x128xf32, #tpu.memory_space<vmem>>) attributes {dimension_semantics = [#tpu.dimension_semantics<parallel>, #tpu.dimension_semantics<parallel>], iteration_bounds = array<i64: 2, 2>, scalar_prefetch = 0 : i64, scratch_operands = 0 : i64, tpu.core_type = #tpu.core_type<tc>, window_params = [{transform_indices = @transform_0, window_bounds = array<i64: 1, 32, 128>}, {transform_indices = @transform_1, window_bounds = array<i64: 1, 32, 128>}, {pipeline_mode = #tpu.pipeline_mode<synchronous>, transform_indices = @transform_2, window_bounds = array<i64: 16, 32>}, {pipeline_mode = #tpu.pipeline_mode<synchronous>, transform_indices = @transform_3, window_bounds = array<i64: 16, 32>}, {pipeline_mode = #tpu.pipeline_mode<synchronous>, transform_indices = @transform_4, window_bounds = array<i64: 16, 1>}, {pipeline_mode = #tpu.pipeline_mode<synchronous>, transform_indices = @transform_5, window_bounds = array<i64: 16, 1>}, {transform_indices = @transform_6, window_bounds = array<i64: 1, 1>}, {transform_indices = @transform_7, window_bounds = array<i64: 1, 32, 128>}]} {
    %c0 = arith.constant 0 : index
    %c0_0 = arith.constant 0 : index
    %c0_1 = arith.constant 0 : index
    %0 = vector.load %arg2[%c0, %c0_0, %c0_1] : memref<1x32x128xbf16, #tpu.memory_space<vmem>>, vector<1x32x128xbf16>
    %1 = vector.shape_cast %0 : vector<1x32x128xbf16> to vector<32x128xbf16>
    %c0_2 = arith.constant 0 : index
    %c0_3 = arith.constant 0 : index
    %c0_4 = arith.constant 0 : index
    %2 = vector.load %arg3[%c0_2, %c0_3, %c0_4] : memref<1x32x128xbf16, #tpu.memory_space<vmem>>, vector<1x32x128xbf16>
    %3 = vector.shape_cast %2 : vector<1x32x128xbf16> to vector<32x128xbf16>
    %c0_5 = arith.constant 0 : index
    %c0_6 = arith.constant 0 : index
    %4 = vector.load %arg4[%c0_5, %c0_6] : memref<16x32xbf16, #tpu.memory_space<vmem>>, vector<16x32xbf16>
    %cst = arith.constant dense<0.000000e+00> : vector<16x128xf32>
    %5 = tpu.matmul %4, %1, %cst {dimension_numbers = #tpu.dot_dimension_numbers<[1], [0], [0], [1], [0, 0, 1, 1], [], []>} : vector<16x32xbf16>, vector<32x128xbf16>, vector<16x128xf32> -> vector<16x128xf32>
    %c0_7 = arith.constant 0 : index
    %c0_8 = arith.constant 0 : index
    %6 = vector.load %arg5[%c0_7, %c0_8] : memref<16x32xbf16, #tpu.memory_space<vmem>>, vector<16x32xbf16>
    %cst_9 = arith.constant dense<0.000000e+00> : vector<16x128xf32>
    %7 = tpu.matmul %6, %3, %cst_9 {dimension_numbers = #tpu.dot_dimension_numbers<[1], [0], [0], [1], [0, 0, 1, 1], [], []>} : vector<16x32xbf16>, vector<32x128xbf16>, vector<16x128xf32> -> vector<16x128xf32>
    %8 = arith.addf %5, %7 : vector<16x128xf32>
    %c0_10 = arith.constant 0 : index
    %c0_11 = arith.constant 0 : index
    %9 = vector.load %arg6[%c0_10, %c0_11] : memref<16x1xf32, #tpu.memory_space<vmem>>, vector<16x1xf32>
    %10 = vector.broadcast %9 : vector<16x1xf32> to vector<16x128xf32>
    %11 = arith.addf %8, %10 : vector<16x128xf32>
    %cst_12 = arith.constant 0.000000e+00 : f32
    %12 = vector.broadcast %cst_12 : f32 to vector<16x128xf32>
    %13 = arith.maximumf %11, %12 : vector<16x128xf32>
    %c0_13 = arith.constant 0 : index
    %c0_14 = arith.constant 0 : index
    %14 = vector.load %arg7[%c0_13, %c0_14] : memref<16x1xf32, #tpu.memory_space<vmem>>, vector<16x1xf32>
    %15 = vector.broadcast %14 : vector<16x1xf32> to vector<16x128xf32>
    %16 = arith.mulf %13, %15 : vector<16x128xf32>
    %cst_15 = arith.constant dense<0.000000e+00> : vector<128xf32>
    %17 = vector.multi_reduction <add>, %16, %cst_15 [0] : vector<16x128xf32> to vector<128xf32>
    %18 = vector.shape_cast %17 : vector<128xf32> to vector<1x128xf32>
    %c0_16 = arith.constant 0 : index
    %c0_17 = arith.constant 0 : index
    %19 = memref.load %arg8[%c0_16, %c0_17] : memref<1x1xf32, #tpu.memory_space<smem>>
    %20 = vector.broadcast %19 : f32 to vector<1x128xf32>
    %21 = arith.addf %18, %20 : vector<1x128xf32>
    %22 = arith.negf %21 : vector<1x128xf32>
    %23 = math.exp %22 : vector<1x128xf32>
    %cst_18 = arith.constant 1.000000e+00 : f32
    %24 = vector.broadcast %cst_18 : f32 to vector<1x128xf32>
    %25 = arith.addf %24, %23 : vector<1x128xf32>
    %26 = arith.divf %24, %25 : vector<1x128xf32>
    %27 = arith.extf %3 : vector<32x128xbf16> to vector<32x128xf32>
    %28 = vector.broadcast %26 : vector<1x128xf32> to vector<32x128xf32>
    %29 = arith.mulf %27, %28 : vector<32x128xf32>
    %c0_19 = arith.constant 0 : index
    %c0_20 = arith.constant 0 : index
    %c0_21 = arith.constant 0 : index
    %30 = vector.load %arg9[%c0_19, %c0_20, %c0_21] : memref<1x32x128xf32, #tpu.memory_space<vmem>>, vector<1x32x128xf32>
    %31 = vector.shape_cast %30 : vector<1x32x128xf32> to vector<32x128xf32>
    %32 = vector.shape_cast %29 : vector<32x128xf32> to vector<1x32x128xf32>
    tpu.vector_store %arg9[%c0_19, %c0_20, %c0_21], %32 {strides = array<i32>} : memref<1x32x128xf32, #tpu.memory_space<vmem>>, vector<1x32x128xf32>,
    return
  }
  func.func @transform_0(%arg0: i32, %arg1: i32) -> (i32, i32, i32) {
    %c0_i32 = arith.constant 0 : i32
    %c0_i32_0 = arith.constant 0 : i32
    return %arg0, %c0_i32, %arg1 : i32, i32, i32
  }
  func.func @transform_1(%arg0: i32, %arg1: i32) -> (i32, i32, i32) {
    %c0_i32 = arith.constant 0 : i32
    %c0_i32_0 = arith.constant 0 : i32
    return %arg0, %c0_i32, %arg1 : i32, i32, i32
  }
  func.func @transform_2(%arg0: i32, %arg1: i32) -> (i32, i32) {
    %c0_i32 = arith.constant 0 : i32
    %c0_i32_0 = arith.constant 0 : i32
    %c0_i32_1 = arith.constant 0 : i32
    return %c0_i32, %c0_i32_0 : i32, i32
  }
  func.func @transform_3(%arg0: i32, %arg1: i32) -> (i32, i32) {
    %c0_i32 = arith.constant 0 : i32
    %c0_i32_0 = arith.constant 0 : i32
    %c0_i32_1 = arith.constant 0 : i32
    return %c0_i32, %c0_i32_0 : i32, i32
  }
  func.func @transform_4(%arg0: i32, %arg1: i32) -> (i32, i32) {
    %c0_i32 = arith.constant 0 : i32
    %c0_i32_0 = arith.constant 0 : i32
    %c0_i32_1 = arith.constant 0 : i32
    return %c0_i32, %c0_i32_0 : i32, i32
  }
  func.func @transform_5(%arg0: i32, %arg1: i32) -> (i32, i32) {
    %c0_i32 = arith.constant 0 : i32
    %c0_i32_0 = arith.constant 0 : i32
    %c0_i32_1 = arith.constant 0 : i32
    return %c0_i32, %c0_i32_0 : i32, i32
  }
  func.func @transform_6(%arg0: i32, %arg1: i32) -> (i32, i32) {
    %c0_i32 = arith.constant 0 : i32
    %c0_i32_0 = arith.constant 0 : i32
    %c0_i32_1 = arith.constant 0 : i32
    return %c0_i32, %c0_i32_0 : i32, i32
  }
  func.func @transform_7(%arg0: i32, %arg1: i32) -> (i32, i32, i32) {
    %c0_i32 = arith.constant 0 : i32
    %c0_i32_0 = arith.constant 0 : i32
    return %arg0, %c0_i32, %arg1 : i32, i32, i32
  }
}

</mosaic_0001>

<llo_original>
// kernel: attention_block_forward.1
$region0: #{attention_block_forward.1}
  #allocation0 [shape = 'u32[]', space=smem, size = 0x4, offset = 0x4, fixed_abs, tag = 'smem constant byte address 0x4 - core index']
  #allocation1 [shape = 'u32[72,128]{1,0:T(1,128)}', space=vmem, size = 0x9000, scoped, tag = 'internal scratch']
  #allocation2 [shape = 'f32[1,1]{1,0:T(1,128)S(6)}', space=smem, size = 0x200, scoped, tag = 'scoped memory for attention_block_forward.1']
  %s0 = inlined_call_operand.vmem [shape: bf16[2,32,256], index: 0, kind: input, shape index: {}]
  %s1 = inlined_call_operand.vmem [shape: bf16[2,32,256], index: 1, kind: input, shape index: {}]
  %s2 = inlined_call_operand.vmem [shape: bf16[16,32], index: 2, kind: input, shape index: {}]
  %s3 = inlined_call_operand.vmem [shape: bf16[16,32], index: 3, kind: input, shape index: {}]
  %s4 = inlined_call_operand.vmem [shape: f32[16,1], index: 4, kind: input, shape index: {}]
  %s5 = inlined_call_operand.vmem [shape: f32[16,1], index: 5, kind: input, shape index: {}]
  %s6 = inlined_call_operand.<no memory space> [shape: f32[1,1], index: 6, kind: input, shape index: {}]
  %s7 = inlined_call_operand.vmem [shape: f32[2,32,256], index: 7, kind: output, shape index: {}]
  %s8 = sld [smem:[#allocation0]]
  $region177: #{attention_block_forward.1} parent=0
    _
  %s10 = ssub.s32 1, %s8
  %s11 = scalar_select 0, %s10, %s8
  %12 = sst [smem:[#allocation2]] %s6
  $region1: #{attention_block_forward.1} parent=0
    #allocation3 [shape = 'u8[16384]{0}', space=vmem, size = 0x4000, scoped, tag = 'input window, operand 0']
    #allocation4 [shape = 'u8[16384]{0}', space=vmem, size = 0x4000, scoped, tag = 'input window, operand 1']
    #allocation5 [shape = 'u8[32768]{0}', space=vmem, size = 0x8000, scoped, tag = 'output window, operand 0']
    loop: start=0, step=1, limit=6
    $region2: #{attention_block_forward.1} parent=1 // loop_pre_header
      _
    $region3: #{attention_block_forward.1} parent=1 // loop_header
      %s14 = sphi 0, %s18
      %p15 = scmp.ge.s32.totalorder %s14, 6
      %s21 = sphi 0, %s33
      %s22 = sphi 0, %s29
      %s23 = sphi 0, %s21
      %s24 = sphi 0, %s22
      %s25 = sphi 0, %s23
      %s26 = sphi 0, %s24
      %s38 = sphi 0, %s40
      %s41 = sphi 0, %s38
      %s42 = sphi 0, %s41
      %s58 = sphi 0, %s42
      %s66 = sphi 0, %s68
      %s69 = sphi 0, %s66
      %s70 = sphi 0, %s69
      %s86 = sphi 0, %s70
      %s90 = sphi 0, %s90
      %s92 = sphi 0, %s90
      %s93 = sphi 0, %s92
      %s107 = sphi 0, %s93
      %s111 = sphi 0, %s111
      %s113 = sphi 0, %s111
      %s114 = sphi 0, %s113
      %s128 = sphi 0, %s114
      %s132 = sphi 0, %s132
      %s134 = sphi 0, %s132
      %s135 = sphi 0, %s134
      %s149 = sphi 0, %s135
      %s153 = sphi 0, %s153
      %s155 = sphi 0, %s153
      %s156 = sphi 0, %s155
      %s170 = sphi 0, %s156
      %s174 = sphi 0, %s174
      %s176 = sphi 0, %s174
      %s177 = sphi 0, %s176
      %s191 = sphi 0, %s177
      %s199 = sphi 0, %s201
      %s202 = sphi 0, %s199
      %s203 = sphi 0, %s202
      %s219 = sphi 0, %s203
    $region4: #{attention_block_forward.1} parent=1 // loop_header_branch
      %17 = sbr.rel (%p15) target = $region8
    $region5: #{attention_block_forward.1} parent=1 // loop_body
      %s19 = ssub.s32 %s14, 1
      %s20 = ssub.s32 %s14, 2
      %s27 = sadd.s32 1, %s22
      %p28 = scmp.ge.s32.totalorder %s27, 2
      %s29 = scalar_select %p28, 0, %s27
      %s30 = sadd.s32 1, %s21
      %s31 = scalar_select %p28, %s30, %s21
      %p32 = scmp.ge.s32.totalorder %s31, 2
      %s33 = scalar_select %p32, 0, %s31
      %s34 = ssub.s32 %s21, %s33
      %s35 = ssub.s32 %s22, %s29
      %s36 = sor.u32 %s34, %s35
      %p37 = scmp.eq.s32.totalorder %s36, 0
      %s39 = sadd.s32 %s38, 1
      %s40 = scalar_select %p37, %s38, %s39
      %p43 = pneg %p37
      %p44 = scmp.eq.s32.totalorder %s14, 3
      %p45 = por %p43, %p44
      %p46 = scmp.ne.s32.totalorder %s38, %s41
      %p47 = scmp.eq.s32.totalorder %s14, 0
      %p48 = por %p46, %p47
      %p49 = scmp.ne.s32.totalorder %s38, %s41
      %p50 = scmp.eq.s32.totalorder %s19, 3
      %p51 = por %p49, %p50
      %p52 = scmp.ne.s32.totalorder %s41, %s42
      %p53 = scmp.eq.s32.totalorder %s19, 0
      %p54 = por %p52, %p53
      %p55 = scmp.ne.s32.totalorder %s41, %s42
      %p56 = scmp.eq.s32.totalorder %s20, 3
      %p57 = por %p55, %p56
      %p59 = scmp.ne.s32.totalorder %s42, %s58
      %p60 = scmp.eq.s32.totalorder %s20, 0
      %p61 = por %p59, %p60
      %s62 = ssub.s32 %s21, %s33
      %s63 = ssub.s32 %s22, %s29
      %s64 = sor.u32 %s62, %s63
      %p65 = scmp.eq.s32.totalorder %s64, 0
      %s67 = sadd.s32 %s66, 1
      %s68 = scalar_select %p65, %s66, %s67
      %p71 = pneg %p65
      %p72 = scmp.eq.s32.totalorder %s14, 3
      %p73 = por %p71, %p72
      %p74 = scmp.ne.s32.totalorder %s66, %s69
      %p75 = scmp.eq.s32.totalorder %s14, 0
      %p76 = por %p74, %p75
      %p77 = scmp.ne.s32.totalorder %s66, %s69
      %p78 = scmp.eq.s32.totalorder %s19, 3
      %p79 = por %p77, %p78
      %p80 = scmp.ne.s32.totalorder %s69, %s70
      %p81 = scmp.eq.s32.totalorder %s19, 0
      %p82 = por %p80, %p81
      %p83 = scmp.ne.s32.totalorder %s69, %s70
      %p84 = scmp.eq.s32.totalorder %s20, 3
      %p85 = por %p83, %p84
      %p87 = scmp.ne.s32.totalorder %s70, %s86
      %p88 = scmp.eq.s32.totalorder %s20, 0
      %p89 = por %p87, %p88
      %s91 = sadd.s32 %s90, 1
      %p94 = scmp.eq.s32.totalorder %s14, 3
      %p95 = scmp.ne.s32.totalorder %s90, %s92
      %p96 = scmp.eq.s32.totalorder %s14, 0
      %p97 = por %p95, %p96
      %p98 = scmp.ne.s32.totalorder %s90, %s92
      %p99 = scmp.eq.s32.totalorder %s19, 3
      %p100 = por %p98, %p99
      %p101 = scmp.ne.s32.totalorder %s92, %s93
      %p102 = scmp.eq.s32.totalorder %s19, 0
      %p103 = por %p101, %p102
      %p104 = scmp.ne.s32.totalorder %s92, %s93
      %p105 = scmp.eq.s32.totalorder %s20, 3
      %p106 = por %p104, %p105
      %p108 = scmp.ne.s32.totalorder %s93, %s107
      %p109 = scmp.eq.s32.totalorder %s20, 0
      %p110 = por %p108, %p109
      %s112 = sadd.s32 %s111, 1
      %p115 = scmp.eq.s32.totalorder %s14, 3
      %p116 = scmp.ne.s32.totalorder %s111, %s113
      %p117 = scmp.eq.s32.totalorder %s14, 0
      %p118 = por %p116, %p117
      %p119 = scmp.ne.s32.totalorder %s111, %s113
      %p120 = scmp.eq.s32.totalorder %s19, 3
      %p121 = por %p119, %p120
      %p122 = scmp.ne.s32.totalorder %s113, %s114
      %p123 = scmp.eq.s32.totalorder %s19, 0
      %p124 = por %p122, %p123
      %p125 = scmp.ne.s32.totalorder %s113, %s114
      %p126 = scmp.eq.s32.totalorder %s20, 3
      %p127 = por %p125, %p126
      %p129 = scmp.ne.s32.totalorder %s114, %s128
      %p130 = scmp.eq.s32.totalorder %s20, 0
      %p131 = por %p129, %p130
      %s133 = sadd.s32 %s132, 1
      %p136 = scmp.eq.s32.totalorder %s14, 3
      %p137 = scmp.ne.s32.totalorder %s132, %s134
      %p138 = scmp.eq.s32.totalorder %s14, 0
      %p139 = por %p137, %p138
      %p140 = scmp.ne.s32.totalorder %s132, %s134
      %p141 = scmp.eq.s32.totalorder %s19, 3
      %p142 = por %p140, %p141
      %p143 = scmp.ne.s32.totalorder %s134, %s135
      %p144 = scmp.eq.s32.totalorder %s19, 0
      %p145 = por %p143, %p144
      %p146 = scmp.ne.s32.totalorder %s134, %s135
      %p147 = scmp.eq.s32.totalorder %s20, 3
      %p148 = por %p146, %p147
      %p150 = scmp.ne.s32.totalorder %s135, %s149
      %p151 = scmp.eq.s32.totalorder %s20, 0
      %p152 = por %p150, %p151
      %s154 = sadd.s32 %s153, 1
      %p157 = scmp.eq.s32.totalorder %s14, 3
      %p158 = scmp.ne.s32.totalorder %s153, %s155
      %p159 = scmp.eq.s32.totalorder %s14, 0
      %p160 = por %p158, %p159
      %p161 = scmp.ne.s32.totalorder %s153, %s155
      %p162 = scmp.eq.s32.totalorder %s19, 3
      %p163 = por %p161, %p162
      %p164 = scmp.ne.s32.totalorder %s155, %s156
      %p165 = scmp.eq.s32.totalorder %s19, 0
      %p166 = por %p164, %p165
      %p167 = scmp.ne.s32.totalorder %s155, %s156
      %p168 = scmp.eq.s32.totalorder %s20, 3
      %p169 = por %p167, %p168
      %p171 = scmp.ne.s32.totalorder %s156, %s170
      %p172 = scmp.eq.s32.totalorder %s20, 0
      %p173 = por %p171, %p172
      %s175 = sadd.s32 %s174, 1
      %p178 = scmp.eq.s32.totalorder %s14, 3
      %p179 = scmp.ne.s32.totalorder %s174, %s176
      %p180 = scmp.eq.s32.totalorder %s14, 0
      %p181 = por %p179, %p180
      %p182 = scmp.ne.s32.totalorder %s174, %s176
      %p183 = scmp.eq.s32.totalorder %s19, 3
      %p184 = por %p182, %p183
      %p185 = scmp.ne.s32.totalorder %s176, %s177
      %p186 = scmp.eq.s32.totalorder %s19, 0
      %p187 = por %p185, %p186
      %p188 = scmp.ne.s32.totalorder %s176, %s177
      %p189 = scmp.eq.s32.totalorder %s20, 3
      %p190 = por %p188, %p189
      %p192 = scmp.ne.s32.totalorder %s177, %s191
      %p193 = scmp.eq.s32.totalorder %s20, 0
      %p194 = por %p192, %p193
      %s195 = ssub.s32 %s21, %s33
      %s196 = ssub.s32 %s22, %s29
      %s197 = sor.u32 %s195, %s196
      %p198 = scmp.eq.s32.totalorder %s197, 0
      %s200 = sadd.s32 %s199, 1
      %s201 = scalar_select %p198, %s199, %s200
      %p204 = pneg %p198
      %p205 = scmp.eq.s32.totalorder %s14, 3
      %p206 = por %p204, %p205
      %p207 = scmp.ne.s32.totalorder %s199, %s202
      %p208 = scmp.eq.s32.totalorder %s14, 0
      %p209 = por %p207, %p208
      %p210 = scmp.ne.s32.totalorder %s199, %s202
      %p211 = scmp.eq.s32.totalorder %s19, 3
      %p212 = por %p210, %p211
      %p213 = scmp.ne.s32.totalorder %s202, %s203
      %p214 = scmp.eq.s32.totalorder %s19, 0
      %p215 = por %p213, %p214
      %p216 = scmp.ne.s32.totalorder %s202, %s203
      %p217 = scmp.eq.s32.totalorder %s20, 3
      %p218 = por %p216, %p217
      %p220 = scmp.ne.s32.totalorder %s203, %s219
      %p221 = scmp.eq.s32.totalorder %s20, 0
      %p222 = por %p220, %p221
      %p223 = scmp.le.s32.totalorder 1, %s14
      %p224 = scmp.lt.s32.totalorder %s14, 5
      %p225 = pnand %p223, %p224
      %p226 = pneg %p225
      // Predicated region
      $region9: #{attention_block_forward.1} parent=5 // pred_check
        _
      $region10: #{attention_block_forward.1} parent=5 // pred_check_branch
        %228 = sbr.rel (%p225) target = $region12
      $region11: #{attention_block_forward.1} parent=5 // pred_region
        %s229 = ssub.s32 %s14, 1
        // Predicated region
        $region13: #{attention_block_forward.1} parent=11 // pred_check
          %p230 = pneg %p103
        $region14: #{attention_block_forward.1} parent=11 // pred_check_branch
          %232 = sbr.rel (%p230) target = $region16
        $region15: #{attention_block_forward.1} parent=11 // pred_region
          _
        $region16: #{attention_block_forward.1} parent=11 // pred_fallthru
          _
        // Predicated region
        $region17: #{attention_block_forward.1} parent=11 // pred_check
          %p233 = pneg %p124
        $region18: #{attention_block_forward.1} parent=11 // pred_check_branch
          %235 = sbr.rel (%p233) target = $region20
        $region19: #{attention_block_forward.1} parent=11 // pred_region
          _
        $region20: #{attention_block_forward.1} parent=11 // pred_fallthru
          _
        // Predicated region
        $region21: #{attention_block_forward.1} parent=11 // pred_check
          %p236 = pneg %p145
        $region22: #{attention_block_forward.1} parent=11 // pred_check_branch
          %238 = sbr.rel (%p236) target = $region24
        $region23: #{attention_block_forward.1} parent=11 // pred_region
          _
        $region24: #{attention_block_forward.1} parent=11 // pred_fallthru
          _
        // Predicated region
        $region25: #{attention_block_forward.1} parent=11 // pred_check
          %p239 = pneg %p166
        $region26: #{attention_block_forward.1} parent=11 // pred_check_branch
          %241 = sbr.rel (%p239) target = $region28
        $region27: #{attention_block_forward.1} parent=11 // pred_region
          _
        $region28: #{attention_block_forward.1} parent=11 // pred_fallthru
          _
        // Predicated region
        $region29: #{attention_block_forward.1} parent=11 // pred_check
          %p242 = pneg %p187
        $region30: #{attention_block_forward.1} parent=11 // pred_check_branch
          %244 = sbr.rel (%p242) target = $region32
        $region31: #{attention_block_forward.1} parent=11 // pred_region
          _
        $region32: #{attention_block_forward.1} parent=11 // pred_fallthru
          _
      $region12: #{attention_block_forward.1} parent=5 // pred_fallthru
        _
      %p245 = scmp.lt.s32.totalorder %s14, 4
      // Predicated region
      $region33: #{attention_block_forward.1} parent=5 // pred_check
        %p246 = pneg %p245
      $region34: #{attention_block_forward.1} parent=5 // pred_check_branch
        %248 = sbr.rel (%p246) target = $region36
      $region35: #{attention_block_forward.1} parent=5 // pred_region
        // Predicated region
        $region37: #{attention_block_forward.1} parent=35 // pred_check
          %p249 = pneg %p48
        $region38: #{attention_block_forward.1} parent=35 // pred_check_branch
          %251 = sbr.rel (%p249) target = $region40
        $region39: #{attention_block_forward.1} parent=35 // pred_region
          %s252 = sand.u32 %s38, 1
          %s253 = sand.u32 %s38, 1
          %s254 = smul.addr %s253, 16
          %s255 = scalar_lea.vmem [#allocation3], %s254
          %s256 = smul.addr %s21, 8
          %s257 = sadd.s32 %s22, %s256
          %s258 = smul.addr %s257, 4
          %s259 = scalar_lea.vmem %s0, %s258
          // Predicated region
          $region41: #{attention_block_forward.1} parent=39 // pred_check
            _
          $region42: #{attention_block_forward.1} parent=39 // pred_check_branch
            %261 = sbr.rel (0) target = $region44
          $region43: #{attention_block_forward.1} parent=39 // pred_region
            // Predicated region
            $region45: #{attention_block_forward.1} parent=43 // pred_check
              _
            $region46: #{attention_block_forward.1} parent=43 // pred_check_branch
              %263 = sbr.rel target = $region48
            $region47: #{attention_block_forward.1} parent=43 // pred_region
              // Predicated region
              $region60: #{attention_block_forward.1} parent=47 // pred_check
                _
              $region61: #{attention_block_forward.1} parent=47 // pred_check_branch
                %285 = sbr.rel (0) target = $region63
              $region62: #{attention_block_forward.1} parent=47 // pred_region
                loop: start=0, step=1, limit=1
                $region64: #{attention_block_forward.1} parent=62 // loop_pre_header
                  _
                $region65: #{attention_block_forward.1} parent=62 // loop_header
                  %s287 = sphi 0, %s291
                  %p288 = scmp.ge.s32.totalorder %s287, 1
                  %s292 = sphi %s259, %s259
                  %s293 = sphi %s255, %s255
                $region66: #{attention_block_forward.1} parent=62 // loop_header_branch
                  %290 = sbr.rel (%p288) target = $region70
                $region67: #{attention_block_forward.1} parent=62 // loop_body
                  _
                $region68: #{attention_block_forward.1} parent=62 // loop_footer
                  %s291 = sadd.s32 1, %s287
                $region69: #{attention_block_forward.1} parent=62 // loop_footer_branch
                  %286 = sbr.rel target = $region65
                $region70: #{attention_block_forward.1} parent=62 // loop_exit
                  _
                %s295 = ssub.s32 16, 1
                loop: start=0, step=1, limit=1
                $region71: #{attention_block_forward.1} parent=62 // loop_pre_header
                  _
                $region72: #{attention_block_forward.1} parent=62 // loop_header
                  %s297 = sphi 0, %s301
                  %p298 = scmp.ge.s32.totalorder %s297, 1
                  %s302 = sphi %s259, %s259
                  %s303 = sphi %s255, %s255
                $region73: #{attention_block_forward.1} parent=62 // loop_header_branch
                  %300 = sbr.rel (%p298) target = $region77
                $region74: #{attention_block_forward.1} parent=62 // loop_body
                  %v304 = vld [vmem:[%s302] sm:%s295]
                  %305 = vst [vmem:[%s303] sm:%s295] %v304
                  %v306 = vld [vmem:[%s302 + $0x8] sm:%s295]
                  %307 = vst [vmem:[%s303 + $0x4] sm:%s295] %v306
                  %v308 = vld [vmem:[%s302 + $0x10] sm:%s295]
                  %309 = vst [vmem:[%s303 + $0x8] sm:%s295] %v308
                  %v310 = vld [vmem:[%s302 + $0x18] sm:%s295]
                  %311 = vst [vmem:[%s303 + $0xc] sm:%s295] %v310
                $region75: #{attention_block_forward.1} parent=62 // loop_footer
                  %s301 = sadd.s32 1, %s297
                $region76: #{attention_block_forward.1} parent=62 // loop_footer_branch
                  %296 = sbr.rel target = $region72
                $region77: #{attention_block_forward.1} parent=62 // loop_exit
                  _
              $region63: #{attention_block_forward.1} parent=47 // pred_fallthru
                _
            $region48: #{attention_block_forward.1} parent=43 // pred_fallthru
              _
            // Predicated region
            $region49: #{attention_block_forward.1} parent=43 // pred_check
              _
            $region50: #{attention_block_forward.1} parent=43 // pred_check_branch
              %265 = sbr.rel (0) target = $region52
            $region51: #{attention_block_forward.1} parent=43 // pred_region
              %s267 = ssub.s32 16, 1
              loop: start=0, step=1, limit=1
              $region53: #{attention_block_forward.1} parent=51 // loop_pre_header
                _
              $region54: #{attention_block_forward.1} parent=51 // loop_header
                %s269 = sphi 0, %s273
                %p270 = scmp.ge.s32.totalorder %s269, 1
                %s274 = sphi %s259, %s259
                %s275 = sphi %s255, %s255
              $region55: #{attention_block_forward.1} parent=51 // loop_header_branch
                %272 = sbr.rel (%p270) target = $region59
              $region56: #{attention_block_forward.1} parent=51 // loop_body
                %v276 = vld [vmem:[%s274] sm:%s267]
                %277 = vst [vmem:[%s275] sm:%s267] %v276
                %v278 = vld [vmem:[%s274 + $0x8] sm:%s267]
                %279 = vst [vmem:[%s275 + $0x4] sm:%s267] %v278
                %v280 = vld [vmem:[%s274 + $0x10] sm:%s267]
                %281 = vst [vmem:[%s275 + $0x8] sm:%s267] %v280
                %v282 = vld [vmem:[%s274 + $0x18] sm:%s267]
                %283 = vst [vmem:[%s275 + $0xc] sm:%s267] %v282
              $region57: #{attention_block_forward.1} parent=51 // loop_footer
                %s273 = sadd.s32 1, %s269
              $region58: #{attention_block_forward.1} parent=51 // loop_footer_branch
                %268 = sbr.rel target = $region54
              $region59: #{attention_block_forward.1} parent=51 // loop_exit
                _
            $region52: #{attention_block_forward.1} parent=43 // pred_fallthru
              _
          $region44: #{attention_block_forward.1} parent=39 // pred_fallthru
            _
          %312 = vnop
        $region40: #{attention_block_forward.1} parent=35 // pred_fallthru
          _
        // Predicated region
        $region78: #{attention_block_forward.1} parent=35 // pred_check
          %p313 = pneg %p76
        $region79: #{attention_block_forward.1} parent=35 // pred_check_branch
          %315 = sbr.rel (%p313) target = $region81
        $region80: #{attention_block_forward.1} parent=35 // pred_region
          %s316 = sand.u32 %s66, 1
          %s317 = sand.u32 %s66, 1
          %s318 = smul.addr %s317, 16
          %s319 = scalar_lea.vmem [#allocation4], %s318
          %s320 = smul.addr %s21, 8
          %s321 = sadd.s32 %s22, %s320
          %s322 = smul.addr %s321, 4
          %s323 = scalar_lea.vmem %s1, %s322
          // Predicated region
          $region82: #{attention_block_forward.1} parent=80 // pred_check
            _
          $region83: #{attention_block_forward.1} parent=80 // pred_check_branch
            %325 = sbr.rel (0) target = $region85
          $region84: #{attention_block_forward.1} parent=80 // pred_region
            // Predicated region
            $region86: #{attention_block_forward.1} parent=84 // pred_check
              _
            $region87: #{attention_block_forward.1} parent=84 // pred_check_branch
              %327 = sbr.rel target = $region89
            $region88: #{attention_block_forward.1} parent=84 // pred_region
              // Predicated region
              $region101: #{attention_block_forward.1} parent=88 // pred_check
                _
              $region102: #{attention_block_forward.1} parent=88 // pred_check_branch
                %349 = sbr.rel (0) target = $region104
              $region103: #{attention_block_forward.1} parent=88 // pred_region
                loop: start=0, step=1, limit=1
                $region105: #{attention_block_forward.1} parent=103 // loop_pre_header
                  _
                $region106: #{attention_block_forward.1} parent=103 // loop_header
                  %s351 = sphi 0, %s355
                  %p352 = scmp.ge.s32.totalorder %s351, 1
                  %s356 = sphi %s323, %s323
                  %s357 = sphi %s319, %s319
                $region107: #{attention_block_forward.1} parent=103 // loop_header_branch
                  %354 = sbr.rel (%p352) target = $region111
                $region108: #{attention_block_forward.1} parent=103 // loop_body
                  _
                $region109: #{attention_block_forward.1} parent=103 // loop_footer
                  %s355 = sadd.s32 1, %s351
                $region110: #{attention_block_forward.1} parent=103 // loop_footer_branch
                  %350 = sbr.rel target = $region106
                $region111: #{attention_block_forward.1} parent=103 // loop_exit
                  _
                %s359 = ssub.s32 16, 1
                loop: start=0, step=1, limit=1
                $region112: #{attention_block_forward.1} parent=103 // loop_pre_header
                  _
                $region113: #{attention_block_forward.1} parent=103 // loop_header
                  %s361 = sphi 0, %s365
                  %p362 = scmp.ge.s32.totalorder %s361, 1
                  %s366 = sphi %s323, %s323
                  %s367 = sphi %s319, %s319
                $region114: #{attention_block_forward.1} parent=103 // loop_header_branch
                  %364 = sbr.rel (%p362) target = $region118
                $region115: #{attention_block_forward.1} parent=103 // loop_body
                  %v368 = vld [vmem:[%s366] sm:%s359]
                  %369 = vst [vmem:[%s367] sm:%s359] %v368
                  %v370 = vld [vmem:[%s366 + $0x8] sm:%s359]
                  %371 = vst [vmem:[%s367 + $0x4] sm:%s359] %v370
                  %v372 = vld [vmem:[%s366 + $0x10] sm:%s359]
                  %373 = vst [vmem:[%s367 + $0x8] sm:%s359] %v372
                  %v374 = vld [vmem:[%s366 + $0x18] sm:%s359]
                  %375 = vst [vmem:[%s367 + $0xc] sm:%s359] %v374
                $region116: #{attention_block_forward.1} parent=103 // loop_footer
                  %s365 = sadd.s32 1, %s361
                $region117: #{attention_block_forward.1} parent=103 // loop_footer_branch
                  %360 = sbr.rel target = $region113
                $region118: #{attention_block_forward.1} parent=103 // loop_exit
                  _
              $region104: #{attention_block_forward.1} parent=88 // pred_fallthru
                _
            $region89: #{attention_block_forward.1} parent=84 // pred_fallthru
              _
            // Predicated region
            $region90: #{attention_block_forward.1} parent=84 // pred_check
              _
            $region91: #{attention_block_forward.1} parent=84 // pred_check_branch
              %329 = sbr.rel (0) target = $region93
            $region92: #{attention_block_forward.1} parent=84 // pred_region
              %s331 = ssub.s32 16, 1
              loop: start=0, step=1, limit=1
              $region94: #{attention_block_forward.1} parent=92 // loop_pre_header
                _
              $region95: #{attention_block_forward.1} parent=92 // loop_header
                %s333 = sphi 0, %s337
                %p334 = scmp.ge.s32.totalorder %s333, 1
                %s338 = sphi %s323, %s323
                %s339 = sphi %s319, %s319
              $region96: #{attention_block_forward.1} parent=92 // loop_header_branch
                %336 = sbr.rel (%p334) target = $region100
              $region97: #{attention_block_forward.1} parent=92 // loop_body
                %v340 = vld [vmem:[%s338] sm:%s331]
                %341 = vst [vmem:[%s339] sm:%s331] %v340
                %v342 = vld [vmem:[%s338 + $0x8] sm:%s331]
                %343 = vst [vmem:[%s339 + $0x4] sm:%s331] %v342
                %v344 = vld [vmem:[%s338 + $0x10] sm:%s331]
                %345 = vst [vmem:[%s339 + $0x8] sm:%s331] %v344
                %v346 = vld [vmem:[%s338 + $0x18] sm:%s331]
                %347 = vst [vmem:[%s339 + $0xc] sm:%s331] %v346
              $region98: #{attention_block_forward.1} parent=92 // loop_footer
                %s337 = sadd.s32 1, %s333
              $region99: #{attention_block_forward.1} parent=92 // loop_footer_branch
                %332 = sbr.rel target = $region95
              $region100: #{attention_block_forward.1} parent=92 // loop_exit
                _
            $region93: #{attention_block_forward.1} parent=84 // pred_fallthru
              _
          $region85: #{attention_block_forward.1} parent=80 // pred_fallthru
            _
          %376 = vnop
        $region81: #{attention_block_forward.1} parent=35 // pred_fallthru
          _
      $region36: #{attention_block_forward.1} parent=5 // pred_fallthru
        _
      %p377 = scmp.le.s32.totalorder 1, %s14
      %p378 = scmp.lt.s32.totalorder %s14, 5
      %p379 = pnand %p377, %p378
      %p380 = pneg %p379
      // Predicated region
      $region119: #{attention_block_forward.1} parent=5 // pred_check
        _
      $region120: #{attention_block_forward.1} parent=5 // pred_check_branch
        %382 = sbr.rel (%p379) target = $region122
      $region121: #{attention_block_forward.1} parent=5 // pred_region
        %s383 = ssub.s32 %s14, 1
        %s384 = sand.u32 %s41, 1
        %s385 = sand.u32 %s41, 1
        %s386 = smul.addr %s385, 16
        %s387 = scalar_lea.vmem [#allocation3], %s386
        // Predicated region
        $region123: #{attention_block_forward.1} parent=121 // pred_check
          %p388 = pneg %p54
        $region124: #{attention_block_forward.1} parent=121 // pred_check_branch
          %390 = sbr.rel (%p388) target = $region126
        $region125: #{attention_block_forward.1} parent=121 // pred_region
          _
        $region126: #{attention_block_forward.1} parent=121 // pred_fallthru
          _
        %s391 = sand.u32 %s69, 1
        %s392 = sand.u32 %s69, 1
        %s393 = smul.addr %s392, 16
        %s394 = scalar_lea.vmem [#allocation4], %s393
        // Predicated region
        $region127: #{attention_block_forward.1} parent=121 // pred_check
          %p395 = pneg %p82
        $region128: #{attention_block_forward.1} parent=121 // pred_check_branch
          %397 = sbr.rel (%p395) target = $region130
        $region129: #{attention_block_forward.1} parent=121 // pred_region
          _
        $region130: #{attention_block_forward.1} parent=121 // pred_fallthru
          _
        %s398 = sand.u32 %s41, 1
        %s399 = sand.u32 %s41, 1
        %s400 = smul.addr %s399, 16
        %s401 = scalar_lea.vmem [#allocation3], %s400
        %p402 = pneg %p54
        %p403 = pneg %p51
        %s404 = sand.u32 %s69, 1
        %s405 = sand.u32 %s69, 1
        %s406 = smul.addr %s405, 16
        %s407 = scalar_lea.vmem [#allocation4], %s406
        %p408 = pneg %p82
        %p409 = pneg %p79
        %p410 = pneg %p103
        %p411 = pneg %p100
        %p412 = pneg %p124
        %p413 = pneg %p121
        %p414 = pneg %p145
        %p415 = pneg %p142
        %p416 = pneg %p166
        %p417 = pneg %p163
        %p418 = pneg %p187
        %p419 = pneg %p184
        %p420 = pneg %p215
        %p421 = pneg %p212
        %s422 = sand.u32 %s202, 1
        %s423 = sand.u32 %s202, 1
        %s424 = smul.addr %s423, 32
        %s425 = scalar_lea.vmem [#allocation5], %s424
        %v427 = vld [vmem:[%s387] sm:$0xf]
        %v428 = vld [vmem:[%s387 + $0x4] sm:$0xf]
        %v429 = vld [vmem:[%s387 + $0x8] sm:$0xf]
        %v430 = vld [vmem:[%s387 + $0xc] sm:$0xf]
        %v431 = vld [vmem:[%s394] sm:$0xf]
        %v432 = vld [vmem:[%s394 + $0x4] sm:$0xf]
        %v433 = vld [vmem:[%s394 + $0x8] sm:$0xf]
        %v434 = vld [vmem:[%s394 + $0xc] sm:$0xf]
        %v435 = vld [vmem:[%s2] sm:$0xf]
        %v436 = vld [vmem:[%s2 + $0x4] sm:$0xf]
        %v437 = vld [vmem:[%s3] sm:$0xf]
        %v438 = vld [vmem:[%s3 + $0x4] sm:$0xf]
        %v441 = vunpack.c.l.b16 %v437
        %v442 = vunpack.c.l.b16 %v438
        %v443 = vpack.c.b16 %v442, %v441
        %v448 = vunpack.c.l.b16 %v431
        %v449 = vunpack.c.l.b16 %v432
        %v450 = vunpack.c.l.b16 %v433
        %v451 = vunpack.c.l.b16 %v434
        %v452 = vpack.c.b16 %v449, %v448
        %v453 = vpack.c.b16 %v451, %v450
        %vm456 = vcmask 261120
        %v458 = vsel %vm456, %v443, 0
        %460 = vmatpush.bf16.msra.mxu0 0
        %461 = vmatpush.bf16.msra.mxu0 0
        %462 = vmatpush.bf16.msra.mxu0 0
        %463 = vmatpush.bf16.msra.mxu0 0
        %464 = vmatpush.bf16.msra.mxu0 0
        %465 = vmatpush.bf16.msra.mxu0 0
        %466 = vmatpush.bf16.msra.mxu0 %v453
        %467 = vmatpush.bf16.msra.mxu0 %v452
        %468 = vmatmul.bf16.gmra.mxu0 %v458
        %v469 = vpop.f32.mrf.mxu0
        %v470 = vadd.f32 0.0, %v469
        %v471 = vpop.f32.mrf.mxu0
        %v472 = vadd.f32 0.0, %v471
        %473 = vdwg.mxu0
        %v476 = vunpack.c.l.b16 %v435
        %v477 = vunpack.c.l.b16 %v436
        %v478 = vpack.c.b16 %v477, %v476
        %v483 = vunpack.c.l.b16 %v427
        %v484 = vunpack.c.l.b16 %v428
        %v485 = vunpack.c.l.b16 %v429
        %v486 = vunpack.c.l.b16 %v430
        %v487 = vpack.c.b16 %v484, %v483
        %v488 = vpack.c.b16 %v486, %v485
        %v492 = vsel %vm456, %v478, 0
        %494 = vmatpush.bf16.msra.mxu0 0
        %495 = vmatpush.bf16.msra.mxu0 0
        %496 = vmatpush.bf16.msra.mxu0 0
        %497 = vmatpush.bf16.msra.mxu0 0
        %498 = vmatpush.bf16.msra.mxu0 0
        %499 = vmatpush.bf16.msra.mxu0 0
        %500 = vmatpush.bf16.msra.mxu0 %v488
        %501 = vmatpush.bf16.msra.mxu0 %v487
        %502 = vmatmul.bf16.gmra.mxu0 %v492
        %v503 = vpop.f32.mrf.mxu0
        %v504 = vadd.f32 %v470, %v503
        %v505 = vpop.f32.mrf.mxu0
        %v506 = vadd.f32 %v472, %v505
        %507 = vdwg.mxu0
        %v508 = vld [vmem:[%s4] sm:$0xff]
        %v509 = vld [vmem:[%s4 + $0x8] sm:$0xff]
        %511 = vset.pattern.permute.xlu0 0
        %512 = vperm.xlu0 %511, %v508
        %v513 = vpop.permute.xlu0 %512
        %516 = vset.pattern.permute.xlu0 0
        %517 = vperm.xlu0 %516, %v509
        %v518 = vpop.permute.xlu0 %517
        %v520 = vadd.f32 %v504, %v513
        %v521 = vadd.f32 %v506, %v518
        %v522 = vmax.f32 %v520, 0.0
        %v523 = vmax.f32 %v521, 0.0
        %v524 = vld [vmem:[%s5] sm:$0xff]
        %v525 = vld [vmem:[%s5 + $0x8] sm:$0xff]
        %527 = vset.pattern.permute.xlu0 0
        %528 = vperm.xlu0 %527, %v524
        %v529 = vpop.permute.xlu0 %528
        %532 = vset.pattern.permute.xlu0 0
        %533 = vperm.xlu0 %532, %v525
        %v534 = vpop.permute.xlu0 %533
        %v536 = vmul.f32 %v522, %v529
        %v537 = vmul.f32 %v523, %v534
        %v538 = vadd.f32 %v536, %v537
        %v539 = vrot.slane %v538, 4
        %v540 = vadd.f32 %v538, %v539
        %v541 = vrot.slane %v540, 2
        %v542 = vadd.f32 %v540, %v541
        %v543 = vrot.slane %v542, 1
        %v544 = vadd.f32 %v542, %v543
        %s545 = sld [smem:[#allocation2]]
        %v546 = vstv %s545
        %v547 = vadd.f32 %v544, %v546
        %v548 = vxor.u32 %v547, 2147483648
        %v549 = vmul.f32 %v548, 1.442695
        %v550 = vpow.pop %v549
        %v551 = vadd.f32 %v550, 1.0
        %v552 = vrcp.pop %v551
        %v553 = vmul.f32 %v551, %v552
        %v554 = vsub.f32 1.0, %v553
        %v555 = vmul.f32 %v552, %v554
        %v556 = vadd.f32 %v552, %v555
        %vm557 = vweird.f32 %v551
        %vm558 = vweird.f32 %v552
        %vm559 = vmor %vm557, %vm558
        %v560 = vsel %vm559, %v552, %v556
        %v561 = vand.u32 2147483647, %v551
        %vm562 = vcmp.eq.f32.partialorder %v561, 8.507059e+37
        %v563 = vand.u32 %v551, 2147483648
        %v564 = vor.u32 1.1754944e-38, %v563
        %v565 = vsel %vm562, %v564, %v560
        %v566 = vmul.f32 1.0, %v565
        %v567 = vunpack.c.l.bf16 %v431
        %v568 = vunpack.c.l.bf16 %v432
        %v569 = vunpack.c.l.bf16 %v433
        %v570 = vunpack.c.l.bf16 %v434
        %v571 = vmul.f32 %v567, %v566
        %v572 = vmul.f32 %v568, %v566
        %v573 = vmul.f32 %v569, %v566
        %v574 = vmul.f32 %v570, %v566
        %575 = vst [vmem:[%s425] sm:$0xff] %v571
        %576 = vst [vmem:[%s425 + $0x8] sm:$0xff] %v572
        %577 = vst [vmem:[%s425 + $0x10] sm:$0xff] %v573
        %578 = vst [vmem:[%s425 + $0x18] sm:$0xff] %v574
        %s579 = sand.u32 %s202, 1
        %s580 = sand.u32 %s202, 1
        %s581 = smul.addr %s580, 32
        %s582 = scalar_lea.vmem [#allocation5], %s581
        // Predicated region
        $region131: #{attention_block_forward.1} parent=121 // pred_check
          %p583 = pneg %p212
        $region132: #{attention_block_forward.1} parent=121 // pred_check_branch
          %585 = sbr.rel (%p583) target = $region134
        $region133: #{attention_block_forward.1} parent=121 // pred_region
          %s586 = smul.addr %s23, 8
          %s587 = sadd.s32 %s24, %s586
          %s588 = smul.addr %s587, 8
          %s589 = scalar_lea.vmem %s7, %s588
          // Predicated region
          $region135: #{attention_block_forward.1} parent=133 // pred_check
            _
          $region136: #{attention_block_forward.1} parent=133 // pred_check_branch
            %591 = sbr.rel (0) target = $region138
          $region137: #{attention_block_forward.1} parent=133 // pred_region
            // Predicated region
            $region139: #{attention_block_forward.1} parent=137 // pred_check
              _
            $region140: #{attention_block_forward.1} parent=137 // pred_check_branch
              %593 = sbr.rel (0) target = $region142
            $region141: #{attention_block_forward.1} parent=137 // pred_region
              // Predicated region
              $region154: #{attention_block_forward.1} parent=141 // pred_check
                _
              $region155: #{attention_block_forward.1} parent=141 // pred_check_branch
                %615 = sbr.rel (0) target = $region157
              $region156: #{attention_block_forward.1} parent=141 // pred_region
                loop: start=0, step=1, limit=1
                $region158: #{attention_block_forward.1} parent=156 // loop_pre_header
                  _
                $region159: #{attention_block_forward.1} parent=156 // loop_header
                  %s617 = sphi 0, %s621
                  %p618 = scmp.ge.s32.totalorder %s617, 1
                  %s622 = sphi %s582, %s582
                  %s623 = sphi %s589, %s589
                $region160: #{attention_block_forward.1} parent=156 // loop_header_branch
                  %620 = sbr.rel (%p618) target = $region164
                $region161: #{attention_block_forward.1} parent=156 // loop_body
                  %v624 = vld [vmem:[%s622] sm:$0xff]
                  %625 = vst [vmem:[%s623] sm:$0xff] %v624
                  %v626 = vld [vmem:[%s622 + $0x8] sm:$0xff]
                  %627 = vst [vmem:[%s623 + $0x10] sm:$0xff] %v626
                  %v628 = vld [vmem:[%s622 + $0x10] sm:$0xff]
                  %629 = vst [vmem:[%s623 + $0x20] sm:$0xff] %v628
                  %v630 = vld [vmem:[%s622 + $0x18] sm:$0xff]
                  %631 = vst [vmem:[%s623 + $0x30] sm:$0xff] %v630
                $region162: #{attention_block_forward.1} parent=156 // loop_footer
                  %s621 = sadd.s32 1, %s617
                $region163: #{attention_block_forward.1} parent=156 // loop_footer_branch
                  %616 = sbr.rel target = $region159
                $region164: #{attention_block_forward.1} parent=156 // loop_exit
                  _
              $region157: #{attention_block_forward.1} parent=141 // pred_fallthru
                _
              // Predicated region
              $region165: #{attention_block_forward.1} parent=141 // pred_check
                _
              $region166: #{attention_block_forward.1} parent=141 // pred_check_branch
                %633 = sbr.rel target = $region168
              $region167: #{attention_block_forward.1} parent=141 // pred_region
                _
              $region168: #{attention_block_forward.1} parent=141 // pred_fallthru
                _
            $region142: #{attention_block_forward.1} parent=137 // pred_fallthru
              _
            // Predicated region
            $region143: #{attention_block_forward.1} parent=137 // pred_check
              _
            $region144: #{attention_block_forward.1} parent=137 // pred_check_branch
              %595 = sbr.rel target = $region146
            $region145: #{attention_block_forward.1} parent=137 // pred_region
              %s597 = ssub.s32 256, 1
              loop: start=0, step=1, limit=1
              $region147: #{attention_block_forward.1} parent=145 // loop_pre_header
                _
              $region148: #{attention_block_forward.1} parent=145 // loop_header
                %s599 = sphi 0, %s603
                %p600 = scmp.ge.s32.totalorder %s599, 1
                %s604 = sphi %s582, %s582
                %s605 = sphi %s589, %s589
              $region149: #{attention_block_forward.1} parent=145 // loop_header_branch
                %602 = sbr.rel (%p600) target = $region153
              $region150: #{attention_block_forward.1} parent=145 // loop_body
                %v606 = vld [vmem:[%s604] sm:%s597]
                %607 = vst [vmem:[%s605] sm:%s597] %v606
                %v608 = vld [vmem:[%s604 + $0x8] sm:%s597]
                %609 = vst [vmem:[%s605 + $0x10] sm:%s597] %v608
                %v610 = vld [vmem:[%s604 + $0x10] sm:%s597]
                %611 = vst [vmem:[%s605 + $0x20] sm:%s597] %v610
                %v612 = vld [vmem:[%s604 + $0x18] sm:%s597]
                %613 = vst [vmem:[%s605 + $0x30] sm:%s597] %v612
              $region151: #{attention_block_forward.1} parent=145 // loop_footer
                %s603 = sadd.s32 1, %s599
              $region152: #{attention_block_forward.1} parent=145 // loop_footer_branch
                %598 = sbr.rel target = $region148
              $region153: #{attention_block_forward.1} parent=145 // loop_exit
                _
            $region146: #{attention_block_forward.1} parent=137 // pred_fallthru
              _
          $region138: #{attention_block_forward.1} parent=133 // pred_fallthru
            _
          %634 = vnop
        $region134: #{attention_block_forward.1} parent=121 // pred_fallthru
          _
      $region122: #{attention_block_forward.1} parent=5 // pred_fallthru
        _
      %p635 = scmp.le.s32.totalorder 2, %s14
      // Predicated region
      $region169: #{attention_block_forward.1} parent=5 // pred_check
        %p636 = pneg %p635
      $region170: #{attention_block_forward.1} parent=5 // pred_check_branch
        %638 = sbr.rel (%p636) target = $region172
      $region171: #{attention_block_forward.1} parent=5 // pred_region
        %s639 = ssub.s32 %s14, 2
        // Predicated region
        $region173: #{attention_block_forward.1} parent=171 // pred_check
          %p640 = pneg %p218
        $region174: #{attention_block_forward.1} parent=171 // pred_check_branch
          %642 = sbr.rel (%p640) target = $region176
        $region175: #{attention_block_forward.1} parent=171 // pred_region
          %s643 = sand.u32 %s203, 1
          %s644 = sand.u32 %s203, 1
          %s645 = smul.addr %s644, 32
          %s646 = scalar_lea.vmem [#allocation5], %s645
        $region176: #{attention_block_forward.1} parent=171 // pred_fallthru
          _
      $region172: #{attention_block_forward.1} parent=5 // pred_fallthru
        _
    $region6: #{attention_block_forward.1} parent=1 // loop_footer
      %s18 = sadd.s32 1, %s14
    $region7: #{attention_block_forward.1} parent=1 // loop_footer_branch
      %13 = sbr.rel target = $region3
    $region8: #{attention_block_forward.1} parent=1 // loop_exit
      _

</llo_original>
